<compile_context>
chip_gen: v7x
topology: tpu7x:2x2x1
jax: 0.10.0
libtpu: 0.0.40
codegen_flags: <defaults>
</compile_context>

<pallas_src>
import functools
import math

import jax
import jax.numpy as jnp
from jax.experimental import pallas as pl
from jax.experimental.pallas import tpu as pltpu

LANE = 128                      # lane width: feature/class dims padded to this
ROW_TILE = 256                  # tiled path: destination-node (row) tile
K_TILE = 256                    # tiled path: source-node (reduction) tile
FUSED_VMEM_BUDGET = 12 << 20    # single-buffer estimate threshold for fused path

F32 = jnp.float32
BF16 = jnp.bfloat16


def _round_up(v, m):
    return ((v + m - 1) // m) * m


def _nbytes(shape, dtype):
    return math.prod(shape) * jnp.dtype(dtype).itemsize


def _vmem_limit(need_bytes):
    # Raise the scoped-VMEM limit if needed; stay well under v7x physical (64 MiB).
    return int(min(max(need_bytes, 32 << 20), 48 << 20))


def _pad2(a, rows, cols):
    return jnp.pad(a, ((0, rows - a.shape[0]), (0, cols - a.shape[1])))


# --------------------------------------------------------------------------- #
# Kernels
# --------------------------------------------------------------------------- #
def _gcn_fused_kernel(a_ref, x_ref, w1_ref, b1_ref, w2_ref, b2_ref,
                      wc_ref, bc_ref, o_ref):
    """Whole-graph fused forward: ReLU(A(A X W1 + b1)_relu W2 + b2) Wc + bc."""
    a = a_ref[...]
    ax = jnp.dot(a, x_ref[...], preferred_element_type=jnp.float32)
    h1 = jnp.maximum(
        jnp.dot(ax.astype(BF16), w1_ref[...], preferred_element_type=jnp.float32)
        + b1_ref[...], 0.0)
    # F.dropout(training=False) -> identity (eval mode).
    ah = jnp.dot(a, h1.astype(BF16), preferred_element_type=jnp.float32)
    h2 = jnp.maximum(
        jnp.dot(ah.astype(BF16), w2_ref[...], preferred_element_type=jnp.float32)
        + b2_ref[...], 0.0)
    o_ref[...] = (
        jnp.dot(h2.astype(BF16), wc_ref[...], preferred_element_type=jnp.float32)
        + bc_ref[...])


def _gcn_layer1_kernel(a_ref, x_ref, w1_ref, b1_ref, h_ref, acc_ref):
    """Tiled: acc += A[i,k] @ X[k]; at last k: H1[i] = ReLU(acc @ W1 + b1)."""
    @pl.when(pl.program_id(1) == 0)
    def _():
        acc_ref[...] = jnp.zeros_like(acc_ref)

    acc_ref[...] += jnp.dot(a_ref[...], x_ref[...],
                            preferred_element_type=jnp.float32)

    @pl.when(pl.program_id(1) == pl.num_programs(1) - 1)
    def _():
        h = jnp.dot(acc_ref[...].astype(BF16), w1_ref[...],
                    preferred_element_type=jnp.float32)
        h = jnp.maximum(h + b1_ref[...], 0.0)
        # F.dropout(training=False) -> identity (eval mode).
        h_ref[...] = h.astype(h_ref.dtype)


def _gcn_layer2_cls_kernel(a_ref, h_ref, w2_ref, b2_ref, wc_ref, bc_ref,
                           o_ref, acc_ref):
    """Tiled: acc += A[i,k] @ H1[k]; at last k: out = ReLU(acc W2 + b2) Wc + bc."""
    @pl.when(pl.program_id(1) == 0)
    def _():
        acc_ref[...] = jnp.zeros_like(acc_ref)

    acc_ref[...] += jnp.dot(a_ref[...], h_ref[...],
                            preferred_element_type=jnp.float32)

    @pl.when(pl.program_id(1) == pl.num_programs(1) - 1)
    def _():
        h2 = jnp.dot(acc_ref[...].astype(BF16), w2_ref[...],
                     preferred_element_type=jnp.float32)
        h2 = jnp.maximum(h2 + b2_ref[...], 0.0)
        # F.dropout(training=False) -> identity (eval mode).
        o_ref[...] = (
            jnp.dot(h2.astype(BF16), wc_ref[...],
                    preferred_element_type=jnp.float32)
            + bc_ref[...])


# --------------------------------------------------------------------------- #
# Plain-JAX glue: normalized adjacency (precomputed once per graph)
# --------------------------------------------------------------------------- #
def build_normalized_adjacency(n, edge_index, edge_weight, dtype=jnp.float32):
    """Dense GCN-normalized adjacency with self-loops (source -> target flow):
         A_hat[t, s] = deg^-1/2[t] * w_edge * deg^-1/2[s]
    so PyG's GCNConv aggregation equals A_hat @ X.  Precompute once per graph."""
    # TODO(synk): for very large graphs replace this O(N^2) densifying scatter with
    # an in-kernel CSR gather via PrefetchScalarGridSpec (edge offsets in SMEM).
    loops = jnp.arange(n, dtype=edge_index.dtype)
    src = jnp.concatenate([edge_index[0], loops])
    dst = jnp.concatenate([edge_index[1], loops])
    w = jnp.concatenate([edge_weight.astype(dtype), jnp.ones((n,), dtype)])
    deg = jnp.zeros((n,), dtype).at[dst].add(w)
    dinv = jnp.where(deg > 0, jax.lax.rsqrt(deg), 0.0)
    norm = dinv[dst] * w * dinv[src]
    return jnp.zeros((n, n), dtype).at[dst, src].add(norm)


# --------------------------------------------------------------------------- #
# Forward paths
# --------------------------------------------------------------------------- #
def _forward_fused(a_p, x_p, params_p, n_pad, f_pad, d_pad, c_pad):
    w1_p, b1_p, w2_p, b2_p, wc_p, bc_p = params_p
    in_bytes = (_nbytes((n_pad, n_pad), BF16) + _nbytes((n_pad, f_pad), BF16)
                + _nbytes((f_pad, d_pad), BF16) + _nbytes((d_pad, d_pad), BF16)
                + _nbytes((d_pad, c_pad), BF16)
                + 2 * _nbytes((1, d_pad), F32) + _nbytes((1, c_pad), F32))
    out_bytes = _nbytes((n_pad, c_pad), F32)
    interm = 4 * n_pad * (f_pad + 3 * d_pad + c_pad)
    ce = pl.CostEstimate(
        flops=2 * n_pad * n_pad * (f_pad + d_pad)
        + 2 * n_pad * d_pad * (f_pad + d_pad + c_pad),
        transcendentals=0,
        bytes_accessed=in_bytes + out_bytes)
    return pl.pallas_call(
        _gcn_fused_kernel,
        out_shape=jax.ShapeDtypeStruct((n_pad, c_pad), F32),
        grid=(1,),
        in_specs=[
            pl.BlockSpec((n_pad, n_pad), lambda i: (0, 0)),   # A_hat
            pl.BlockSpec((n_pad, f_pad), lambda i: (0, 0)),   # X
            pl.BlockSpec((f_pad, d_pad), lambda i: (0, 0)),   # W1
            pl.BlockSpec((1, d_pad), lambda i: (0, 0)),       # b1
            pl.BlockSpec((d_pad, d_pad), lambda i: (0, 0)),   # W2
            pl.BlockSpec((1, d_pad), lambda i: (0, 0)),       # b2
            pl.BlockSpec((d_pad, c_pad), lambda i: (0, 0)),   # Wc
            pl.BlockSpec((1, c_pad), lambda i: (0, 0)),       # bc
        ],
        out_specs=pl.BlockSpec((n_pad, c_pad), lambda i: (0, 0)),
        compiler_params=pltpu.CompilerParams(
            dimension_semantics=("arbitrary",),
            vmem_limit_bytes=_vmem_limit(2 * (in_bytes + out_bytes) + interm
                                         + (2 << 20)),
        ),
        cost_estimate=ce,
    )(a_p, x_p, w1_p, b1_p, w2_p, b2_p, wc_p, bc_p)


def _forward_tiled(a_p, x_p, params_p, n_pad, f_pad, d_pad, c_pad):
    w1_p, b1_p, w2_p, b2_p, wc_p, bc_p = params_p
    tm, tk = ROW_TILE, K_TILE
    grid = (n_pad // tm, n_pad // tk)

    # ----- layer 1: H1 = ReLU((A_hat @ X) @ W1 + b1) ------------------------ #
    blk1 = (_nbytes((tm, tk), BF16) + _nbytes((tk, f_pad), BF16)
            + _nbytes((f_pad, d_pad), BF16) + _nbytes((1, d_pad), F32)
            + _nbytes((tm, d_pad), BF16))
    scr1 = _nbytes((tm, f_pad), F32)
    ce1 = pl.CostEstimate(
        flops=2 * n_pad * n_pad * f_pad + 2 * n_pad * f_pad * d_pad,
        transcendentals=0,
        bytes_accessed=_nbytes((n_pad, n_pad), BF16) + _nbytes((n_pad, f_pad), BF16)
        + _nbytes((f_pad, d_pad), BF16) + _nbytes((n_pad, d_pad), BF16))
    h1 = pl.pallas_call(
        _gcn_layer1_kernel,
        out_shape=jax.ShapeDtypeStruct((n_pad, d_pad), BF16),
        grid=grid,
        in_specs=[
            pl.BlockSpec((tm, tk), lambda i, k: (i, k)),      # A_hat tile
            pl.BlockSpec((tk, f_pad), lambda i, k: (k, 0)),   # X source-rows
            pl.BlockSpec((f_pad, d_pad), lambda i, k: (0, 0)),  # W1 (resident)
            pl.BlockSpec((1, d_pad), lambda i, k: (0, 0)),      # b1
        ],
        out_specs=pl.BlockSpec((tm, d_pad), lambda i, k: (i, 0)),
        scratch_shapes=[pltpu.VMEM((tm, f_pad), F32)],
        compiler_params=pltpu.CompilerParams(
            dimension_semantics=("parallel", "arbitrary"),
            vmem_limit_bytes=_vmem_limit(2 * blk1 + scr1 + (2 << 20)),
        ),
        cost_estimate=ce1,
    )(a_p, x_p, w1_p, b1_p)

    # ----- layer 2 + classifier: ReLU((A_hat @ H1) @ W2 + b2) @ Wc + bc ----- #
    blk2 = (_nbytes((tm, tk), BF16) + _nbytes((tk, d_pad), BF16)
            + _nbytes((d_pad, d_pad), BF16) + _nbytes((1, d_pad), F32)
            + _nbytes((d_pad, c_pad), BF16) + _nbytes((1, c_pad), F32)
            + _nbytes((tm, c_pad), F32))
    scr2 = _nbytes((tm, d_pad), F32)
    ce2 = pl.CostEstimate(
        flops=2 * n_pad * n_pad * d_pad + 2 * n_pad * d_pad * d_pad
        + 2 * n_pad * d_pad * c_pad,
        transcendentals=0,
        bytes_accessed=_nbytes((n_pad, n_pad), BF16) + _nbytes((n_pad, d_pad), BF16)
        + _nbytes((d_pad, d_pad), BF16) + _nbytes((d_pad, c_pad), BF16)
        + _nbytes((n_pad, c_pad), F32))
    out_p = pl.pallas_call(
        _gcn_layer2_cls_kernel,
        out_shape=jax.ShapeDtypeStruct((n_pad, c_pad), F32),
        grid=grid,
        in_specs=[
            pl.BlockSpec((tm, tk), lambda i, k: (i, k)),        # A_hat tile
            pl.BlockSpec((tk, d_pad), lambda i, k: (k, 0)),     # H1 source-rows
            pl.BlockSpec((d_pad, d_pad), lambda i, k: (0, 0)),  # W2 (resident)
            pl.BlockSpec((1, d_pad), lambda i, k: (0, 0)),      # b2
            pl.BlockSpec((d_pad, c_pad), lambda i, k: (0, 0)),  # Wc (lane-padded)
            pl.BlockSpec((1, c_pad), lambda i, k: (0, 0)),      # bc (lane-padded)
        ],
        out_specs=pl.BlockSpec((tm, c_pad), lambda i, k: (i, 0)),
        scratch_shapes=[pltpu.VMEM((tm, d_pad), F32)],
        compiler_params=pltpu.CompilerParams(
            dimension_semantics=("parallel", "arbitrary"),
            vmem_limit_bytes=_vmem_limit(2 * blk2 + scr2 + (2 << 20)),
        ),
        cost_estimate=ce2,
    )(a_p, h1, w2_p, b2_p, wc_p, bc_p)
    return out_p


# --------------------------------------------------------------------------- #
# Forward pass (eval mode): conv1 -> ReLU -> conv2 -> ReLU -> Linear
# --------------------------------------------------------------------------- #
@functools.partial(jax.jit, static_argnames=("force_tiled",))
def gcn_forward(x, a_hat, params, force_tiled=False):
    """x: (N, n_feat) f32; a_hat: (N, N) f32 (from build_normalized_adjacency);
    params = (w1 (F,D), b1 (D,), w2 (D,D), b2 (D,), wc (D,C), bc (C,))."""
    w1, b1, w2, b2, wc, bc = params
    n, n_feat = x.shape
    n_dims = w1.shape[1]
    n_clss = wc.shape[1]

    f_pad = _round_up(n_feat, LANE)
    d_pad = _round_up(n_dims, LANE)
    c_pad = _round_up(n_clss, LANE)

    # Path selection (static, based on a single-buffer VMEM estimate of the
    # whole-graph fused kernel).
    n_pad_fused = _round_up(n, LANE)
    fused_est = (_nbytes((n_pad_fused, n_pad_fused), BF16)
                 + _nbytes((n_pad_fused, f_pad), BF16)
                 + _nbytes((n_pad_fused, c_pad), F32)
                 + 4 * n_pad_fused * (f_pad + 3 * d_pad + c_pad)
                 + _nbytes((f_pad, d_pad), BF16) + _nbytes((d_pad, d_pad), BF16)
                 + _nbytes((d_pad, c_pad), BF16))
    use_fused = (not force_tiled) and fused_est <= FUSED_VMEM_BUDGET
    n_pad = n_pad_fused if use_fused else _round_up(n, max(ROW_TILE, K_TILE))

    a_p = _pad2(a_hat, n_pad, n_pad).astype(BF16)
    x_p = _pad2(x, n_pad, f_pad).astype(BF16)
    w1_p = _pad2(w1, f_pad, d_pad).astype(BF16)
    w2_p = _pad2(w2, d_pad, d_pad).astype(BF16)
    wc_p = _pad2(wc, d_pad, c_pad).astype(BF16)
    b1_p = jnp.pad(b1, (0, d_pad - n_dims)).reshape(1, d_pad).astype(F32)
    b2_p = jnp.pad(b2, (0, d_pad - n_dims)).reshape(1, d_pad).astype(F32)
    bc_p = jnp.pad(bc, (0, c_pad - n_clss)).reshape(1, c_pad).astype(F32)
    params_p = (w1_p, b1_p, w2_p, b2_p, wc_p, bc_p)

    if use_fused:
        out_p = _forward_fused(a_p, x_p, params_p, n_pad, f_pad, d_pad, c_pad)
    else:
        out_p = _forward_tiled(a_p, x_p, params_p, n_pad, f_pad, d_pad, c_pad)

    # Strip row / class padding back to the logical logits.
    return out_p[:n, :n_clss]


def _gcn_reference(x, a_hat, params):
    """Pure-JAX f32 reference for correctness checks."""
    w1, b1, w2, b2, wc, bc = params
    h1 = jax.nn.relu(a_hat @ x @ w1 + b1)
    h2 = jax.nn.relu(a_hat @ h1 @ w2 + b2)
    return h2 @ wc + bc


if __name__ == "__main__":
    key = jax.random.PRNGKey(0)
    n_feat, n_dims, n_clss = 10, 128, 10          # matches GCN.__init__ defaults
    kp, kg1, kg2 = jax.random.split(key, 3)

    # Parameter init (shapes from the module): GCNConv lin weight stored (in, out);
    # nn.Linear weight stored pre-transposed as (n_dims, n_clss) so kernels do h@Wc.
    ks = jax.random.split(kp, 4)
    w1 = jax.random.normal(ks[0], (n_feat, n_dims), F32) * 0.1
    b1 = jnp.zeros((n_dims,), F32)
    w2 = jax.random.normal(ks[1], (n_dims, n_dims), F32) * 0.1
    b2 = jnp.zeros((n_dims,), F32)
    wc = jax.random.normal(ks[2], (n_dims, n_clss), F32) * 0.1
    bc = jax.random.normal(ks[3], (n_clss,), F32) * 0.01
    params = (w1, b1, w2, b2, wc, bc)

    def make_graph(k, n_nodes, n_edges):
        k0, k1, k2, k3 = jax.random.split(k, 4)
        xg = jax.random.normal(k0, (n_nodes, n_feat), F32)
        src = jax.random.randint(k1, (n_edges,), 0, n_nodes, dtype=jnp.int32)
        dst = jax.random.randint(k2, (n_edges,), 0, n_nodes, dtype=jnp.int32)
        ei = jnp.stack([src, dst])                # (2, E), like data.edge_index
        ew = jax.random.uniform(k3, (n_edges,), F32, 0.1, 1.0)
        return xg, ei, ew

    # Small graph -> fully-fused single-kernel path.
    x_s, ei_s, ew_s = make_graph(kg1, 32, 64)
    a_s = build_normalized_adjacency(32, ei_s, ew_s)
    out_s = gcn_forward(x_s, a_s, params)
    jax.block_until_ready(out_s)
    ref_s = _gcn_reference(x_s, a_s, params)
    assert out_s.shape == (32, n_clss)
    assert bool(jnp.all(jnp.isfinite(out_s)))
    assert bool(jnp.allclose(out_s, ref_s, atol=5e-2, rtol=5e-2)), \
        float(jnp.max(jnp.abs(out_s - ref_s)))

    # Medium graph forced down the tiled path (row-parallel x k-reduction grid).
    x_m, ei_m, ew_m = make_graph(kg2, 600, 2400)
    a_m = build_normalized_adjacency(600, ei_m, ew_m)
    out_m = gcn_forward(x_m, a_m, params, force_tiled=True)
    jax.block_until_ready(out_m)
    ref_m = _gcn_reference(x_m, a_m, params)
    assert out_m.shape == (600, n_clss)
    assert bool(jnp.all(jnp.isfinite(out_m)))
    assert bool(jnp.allclose(out_m, ref_m, atol=5e-2, rtol=5e-2)), \
        float(jnp.max(jnp.abs(out_m - ref_m)))

    print("KERNEL_OK")
</pallas_src>

<mosaic_0001>
module attributes {stable_mosaic.version = 11 : i64} {
  func.func @_gcn_fused_kernel(%arg0: i32, %arg1: memref<128x128xbf16, #tpu.memory_space<vmem>>, %arg2: memref<128x128xbf16, #tpu.memory_space<vmem>>, %arg3: memref<128x128xbf16, #tpu.memory_space<vmem>>, %arg4: memref<1x128xf32, #tpu.memory_space<vmem>>, %arg5: memref<128x128xbf16, #tpu.memory_space<vmem>>, %arg6: memref<1x128xf32, #tpu.memory_space<vmem>>, %arg7: memref<128x128xbf16, #tpu.memory_space<vmem>>, %arg8: memref<1x128xf32, #tpu.memory_space<vmem>>, %arg9: memref<128x128xf32, #tpu.memory_space<vmem>>) attributes {dimension_semantics = [#tpu.dimension_semantics<arbitrary>], iteration_bounds = array<i64: 1>, scalar_prefetch = 0 : i64, scratch_operands = 0 : i64, tpu.core_type = #tpu.core_type<tc>, window_params = [{pipeline_mode = #tpu.pipeline_mode<synchronous>, transform_indices = @transform_0, window_bounds = array<i64: 128, 128>}, {pipeline_mode = #tpu.pipeline_mode<synchronous>, transform_indices = @transform_1, window_bounds = array<i64: 128, 128>}, {pipeline_mode = #tpu.pipeline_mode<synchronous>, transform_indices = @transform_2, window_bounds = array<i64: 128, 128>}, {pipeline_mode = #tpu.pipeline_mode<synchronous>, transform_indices = @transform_3, window_bounds = array<i64: 1, 128>}, {pipeline_mode = #tpu.pipeline_mode<synchronous>, transform_indices = @transform_4, window_bounds = array<i64: 128, 128>}, {pipeline_mode = #tpu.pipeline_mode<synchronous>, transform_indices = @transform_5, window_bounds = array<i64: 1, 128>}, {pipeline_mode = #tpu.pipeline_mode<synchronous>, transform_indices = @transform_6, window_bounds = array<i64: 128, 128>}, {pipeline_mode = #tpu.pipeline_mode<synchronous>, transform_indices = @transform_7, window_bounds = array<i64: 1, 128>}, {pipeline_mode = #tpu.pipeline_mode<synchronous>, transform_indices = @transform_8, window_bounds = array<i64: 128, 128>}]} {
    %c0 = arith.constant 0 : index
    %c0_0 = arith.constant 0 : index
    %0 = vector.load %arg1[%c0, %c0_0] : memref<128x128xbf16, #tpu.memory_space<vmem>>, vector<128x128xbf16>
    %c0_1 = arith.constant 0 : index
    %c0_2 = arith.constant 0 : index
    %1 = vector.load %arg2[%c0_1, %c0_2] : memref<128x128xbf16, #tpu.memory_space<vmem>>, vector<128x128xbf16>
    %cst = arith.constant dense<0.000000e+00> : vector<128x128xf32>
    %2 = tpu.matmul %0, %1, %cst {dimension_numbers = #tpu.dot_dimension_numbers<[1], [0], [0], [1], [0, 0, 1, 1], [], []>} : vector<128x128xbf16>, vector<128x128xbf16>, vector<128x128xf32> -> vector<128x128xf32>
    %3 = arith.truncf %2 : vector<128x128xf32> to vector<128x128xbf16>
    %c0_3 = arith.constant 0 : index
    %c0_4 = arith.constant 0 : index
    %4 = vector.load %arg3[%c0_3, %c0_4] : memref<128x128xbf16, #tpu.memory_space<vmem>>, vector<128x128xbf16>
    %cst_5 = arith.constant dense<0.000000e+00> : vector<128x128xf32>
    %5 = tpu.matmul %3, %4, %cst_5 {dimension_numbers = #tpu.dot_dimension_numbers<[1], [0], [0], [1], [0, 0, 1, 1], [], []>} : vector<128x128xbf16>, vector<128x128xbf16>, vector<128x128xf32> -> vector<128x128xf32>
    %c0_6 = arith.constant 0 : index
    %c0_7 = arith.constant 0 : index
    %6 = vector.load %arg4[%c0_6, %c0_7] : memref<1x128xf32, #tpu.memory_space<vmem>>, vector<1x128xf32>
    %7 = vector.broadcast %6 : vector<1x128xf32> to vector<128x128xf32>
    %8 = arith.addf %5, %7 : vector<128x128xf32>
    %cst_8 = arith.constant 0.000000e+00 : f32
    %9 = vector.broadcast %cst_8 : f32 to vector<128x128xf32>
    %10 = arith.maximumf %8, %9 : vector<128x128xf32>
    %11 = arith.truncf %10 : vector<128x128xf32> to vector<128x128xbf16>
    %cst_9 = arith.constant dense<0.000000e+00> : vector<128x128xf32>
    %12 = tpu.matmul %0, %11, %cst_9 {dimension_numbers = #tpu.dot_dimension_numbers<[1], [0], [0], [1], [0, 0, 1, 1], [], []>} : vector<128x128xbf16>, vector<128x128xbf16>, vector<128x128xf32> -> vector<128x128xf32>
    %13 = arith.truncf %12 : vector<128x128xf32> to vector<128x128xbf16>
    %c0_10 = arith.constant 0 : index
    %c0_11 = arith.constant 0 : index
    %14 = vector.load %arg5[%c0_10, %c0_11] : memref<128x128xbf16, #tpu.memory_space<vmem>>, vector<128x128xbf16>
    %cst_12 = arith.constant dense<0.000000e+00> : vector<128x128xf32>
    %15 = tpu.matmul %13, %14, %cst_12 {dimension_numbers = #tpu.dot_dimension_numbers<[1], [0], [0], [1], [0, 0, 1, 1], [], []>} : vector<128x128xbf16>, vector<128x128xbf16>, vector<128x128xf32> -> vector<128x128xf32>
    %c0_13 = arith.constant 0 : index
    %c0_14 = arith.constant 0 : index
    %16 = vector.load %arg6[%c0_13, %c0_14] : memref<1x128xf32, #tpu.memory_space<vmem>>, vector<1x128xf32>
    %17 = vector.broadcast %16 : vector<1x128xf32> to vector<128x128xf32>
    %18 = arith.addf %15, %17 : vector<128x128xf32>
    %cst_15 = arith.constant 0.000000e+00 : f32
    %19 = vector.broadcast %cst_15 : f32 to vector<128x128xf32>
    %20 = arith.maximumf %18, %19 : vector<128x128xf32>
    %21 = arith.truncf %20 : vector<128x128xf32> to vector<128x128xbf16>
    %c0_16 = arith.constant 0 : index
    %c0_17 = arith.constant 0 : index
    %22 = vector.load %arg7[%c0_16, %c0_17] : memref<128x128xbf16, #tpu.memory_space<vmem>>, vector<128x128xbf16>
    %cst_18 = arith.constant dense<0.000000e+00> : vector<128x128xf32>
    %23 = tpu.matmul %21, %22, %cst_18 {dimension_numbers = #tpu.dot_dimension_numbers<[1], [0], [0], [1], [0, 0, 1, 1], [], []>} : vector<128x128xbf16>, vector<128x128xbf16>, vector<128x128xf32> -> vector<128x128xf32>
    %c0_19 = arith.constant 0 : index
    %c0_20 = arith.constant 0 : index
    %24 = vector.load %arg8[%c0_19, %c0_20] : memref<1x128xf32, #tpu.memory_space<vmem>>, vector<1x128xf32>
    %25 = vector.broadcast %24 : vector<1x128xf32> to vector<128x128xf32>
    %26 = arith.addf %23, %25 : vector<128x128xf32>
    %c0_21 = arith.constant 0 : index
    %c0_22 = arith.constant 0 : index
    %27 = vector.load %arg9[%c0_21, %c0_22] : memref<128x128xf32, #tpu.memory_space<vmem>>, vector<128x128xf32>
    tpu.vector_store %arg9[%c0_21, %c0_22], %26 {strides = array<i32>} : memref<128x128xf32, #tpu.memory_space<vmem>>, vector<128x128xf32>,
    return
  }
  func.func @transform_0(%arg0: i32) -> (i32, i32) {
    %c0_i32 = arith.constant 0 : i32
    %c0_i32_0 = arith.constant 0 : i32
    %c0_i32_1 = arith.constant 0 : i32
    return %c0_i32, %c0_i32_0 : i32, i32
  }
  func.func @transform_1(%arg0: i32) -> (i32, i32) {
    %c0_i32 = arith.constant 0 : i32
    %c0_i32_0 = arith.constant 0 : i32
    %c0_i32_1 = arith.constant 0 : i32
    return %c0_i32, %c0_i32_0 : i32, i32
  }
  func.func @transform_2(%arg0: i32) -> (i32, i32) {
    %c0_i32 = arith.constant 0 : i32
    %c0_i32_0 = arith.constant 0 : i32
    %c0_i32_1 = arith.constant 0 : i32
    return %c0_i32, %c0_i32_0 : i32, i32
  }
  func.func @transform_3(%arg0: i32) -> (i32, i32) {
    %c0_i32 = arith.constant 0 : i32
    %c0_i32_0 = arith.constant 0 : i32
    %c0_i32_1 = arith.constant 0 : i32
    return %c0_i32, %c0_i32_0 : i32, i32
  }
  func.func @transform_4(%arg0: i32) -> (i32, i32) {
    %c0_i32 = arith.constant 0 : i32
    %c0_i32_0 = arith.constant 0 : i32
    %c0_i32_1 = arith.constant 0 : i32
    return %c0_i32, %c0_i32_0 : i32, i32
  }
  func.func @transform_5(%arg0: i32) -> (i32, i32) {
    %c0_i32 = arith.constant 0 : i32
    %c0_i32_0 = arith.constant 0 : i32
    %c0_i32_1 = arith.constant 0 : i32
    return %c0_i32, %c0_i32_0 : i32, i32
  }
  func.func @transform_6(%arg0: i32) -> (i32, i32) {
    %c0_i32 = arith.constant 0 : i32
    %c0_i32_0 = arith.constant 0 : i32
    %c0_i32_1 = arith.constant 0 : i32
    return %c0_i32, %c0_i32_0 : i32, i32
  }
  func.func @transform_7(%arg0: i32) -> (i32, i32) {
    %c0_i32 = arith.constant 0 : i32
    %c0_i32_0 = arith.constant 0 : i32
    %c0_i32_1 = arith.constant 0 : i32
    return %c0_i32, %c0_i32_0 : i32, i32
  }
  func.func @transform_8(%arg0: i32) -> (i32, i32) {
    %c0_i32 = arith.constant 0 : i32
    %c0_i32_0 = arith.constant 0 : i32
    %c0_i32_1 = arith.constant 0 : i32
    return %c0_i32, %c0_i32_0 : i32, i32
  }
}

</mosaic_0001>

<llo_original>
// kernel: gcn_forward.1
$region0: #{gcn_forward.1}
  #allocation0 [shape = 'u32[]', space=smem, size = 0x4, offset = 0x4, fixed_abs, tag = 'smem constant byte address 0x4 - core index']
  #allocation1 [shape = 'u32[144,128]{1,0:T(1,128)}', space=vmem, size = 0x12000, scoped, tag = 'internal scratch']
  %s0 = inlined_call_operand.vmem [shape: bf16[128,128], index: 0, kind: input, shape index: {}]
  %s1 = inlined_call_operand.vmem [shape: bf16[128,128], index: 1, kind: input, shape index: {}]
  %s2 = inlined_call_operand.vmem [shape: bf16[128,128], index: 2, kind: input, shape index: {}]
  %s3 = inlined_call_operand.vmem [shape: f32[1,128], index: 3, kind: input, shape index: {}]
  %s4 = inlined_call_operand.vmem [shape: bf16[128,128], index: 4, kind: input, shape index: {}]
  %s5 = inlined_call_operand.vmem [shape: f32[1,128], index: 5, kind: input, shape index: {}]
  %s6 = inlined_call_operand.vmem [shape: bf16[128,128], index: 6, kind: input, shape index: {}]
  %s7 = inlined_call_operand.vmem [shape: f32[1,128], index: 7, kind: input, shape index: {}]
  %s8 = inlined_call_operand.vmem [shape: f32[128,128], index: 8, kind: output, shape index: {}]
  %s9 = sld [smem:[#allocation0]]
  $region42: #{gcn_forward.1} parent=0
    _
  %s11 = ssub.s32 1, %s9
  %s12 = scalar_select 0, %s11, %s9
  // Predicated region
  $region2: #{gcn_forward.1} parent=0 // pred_check
    _
  $region3: #{gcn_forward.1} parent=0 // pred_check_branch
    %14 = sbr.rel (0) target = $region5
  $region4: #{gcn_forward.1} parent=0 // pred_region
    _
  $region5: #{gcn_forward.1} parent=0 // pred_fallthru
    _
  // Predicated region
  $region6: #{gcn_forward.1} parent=0 // pred_check
    _
  $region7: #{gcn_forward.1} parent=0 // pred_check_branch
    %16 = sbr.rel (0) target = $region9
  $region8: #{gcn_forward.1} parent=0 // pred_region
    _
  $region9: #{gcn_forward.1} parent=0 // pred_fallthru
    _
  // Predicated region
  $region10: #{gcn_forward.1} parent=0 // pred_check
    _
  $region11: #{gcn_forward.1} parent=0 // pred_check_branch
    %18 = sbr.rel (0) target = $region13
  $region12: #{gcn_forward.1} parent=0 // pred_region
    _
  $region13: #{gcn_forward.1} parent=0 // pred_fallthru
    _
  // Predicated region
  $region14: #{gcn_forward.1} parent=0 // pred_check
    _
  $region15: #{gcn_forward.1} parent=0 // pred_check_branch
    %20 = sbr.rel (0) target = $region17
  $region16: #{gcn_forward.1} parent=0 // pred_region
    _
  $region17: #{gcn_forward.1} parent=0 // pred_fallthru
    _
  // Predicated region
  $region18: #{gcn_forward.1} parent=0 // pred_check
    _
  $region19: #{gcn_forward.1} parent=0 // pred_check_branch
    %22 = sbr.rel (0) target = $region21
  $region20: #{gcn_forward.1} parent=0 // pred_region
    _
  $region21: #{gcn_forward.1} parent=0 // pred_fallthru
    _
  // Predicated region
  $region22: #{gcn_forward.1} parent=0 // pred_check
    _
  $region23: #{gcn_forward.1} parent=0 // pred_check_branch
    %24 = sbr.rel (0) target = $region25
  $region24: #{gcn_forward.1} parent=0 // pred_region
    _
  $region25: #{gcn_forward.1} parent=0 // pred_fallthru
    _
  // Predicated region
  $region26: #{gcn_forward.1} parent=0 // pred_check
    _
  $region27: #{gcn_forward.1} parent=0 // pred_check_branch
    %26 = sbr.rel (0) target = $region29
  $region28: #{gcn_forward.1} parent=0 // pred_region
    _
  $region29: #{gcn_forward.1} parent=0 // pred_fallthru
    _
  // Predicated region
  $region30: #{gcn_forward.1} parent=0 // pred_check
    _
  $region31: #{gcn_forward.1} parent=0 // pred_check_branch
    %28 = sbr.rel (0) target = $region33
  $region32: #{gcn_forward.1} parent=0 // pred_region
    _
  $region33: #{gcn_forward.1} parent=0 // pred_fallthru
    _
  %v30 = vld [vmem:[%s0] sm:$0xf]
  %v31 = vld [vmem:[%s0 + $0x4] sm:$0xf]
  %v32 = vld [vmem:[%s0 + $0x8] sm:$0xf]
  %v33 = vld [vmem:[%s0 + $0xc] sm:$0xf]
  %v34 = vld [vmem:[%s0 + $0x10] sm:$0xf]
  %v35 = vld [vmem:[%s0 + $0x14] sm:$0xf]
  %v36 = vld [vmem:[%s0 + $0x18] sm:$0xf]
  %v37 = vld [vmem:[%s0 + $0x1c] sm:$0xf]
  %v38 = vld [vmem:[%s0 + $0x20] sm:$0xf]
  %v39 = vld [vmem:[%s0 + $0x24] sm:$0xf]
  %v40 = vld [vmem:[%s0 + $0x28] sm:$0xf]
  %v41 = vld [vmem:[%s0 + $0x2c] sm:$0xf]
  %v42 = vld [vmem:[%s0 + $0x30] sm:$0xf]
  %v43 = vld [vmem:[%s0 + $0x34] sm:$0xf]
  %v44 = vld [vmem:[%s0 + $0x38] sm:$0xf]
  %v45 = vld [vmem:[%s0 + $0x3c] sm:$0xf]
  %v46 = vld [vmem:[%s1] sm:$0xf]
  %v47 = vld [vmem:[%s1 + $0x4] sm:$0xf]
  %v48 = vld [vmem:[%s1 + $0x8] sm:$0xf]
  %v49 = vld [vmem:[%s1 + $0xc] sm:$0xf]
  %v50 = vld [vmem:[%s1 + $0x10] sm:$0xf]
  %v51 = vld [vmem:[%s1 + $0x14] sm:$0xf]
  %v52 = vld [vmem:[%s1 + $0x18] sm:$0xf]
  %v53 = vld [vmem:[%s1 + $0x1c] sm:$0xf]
  %v54 = vld [vmem:[%s1 + $0x20] sm:$0xf]
  %v55 = vld [vmem:[%s1 + $0x24] sm:$0xf]
  %v56 = vld [vmem:[%s1 + $0x28] sm:$0xf]
  %v57 = vld [vmem:[%s1 + $0x2c] sm:$0xf]
  %v58 = vld [vmem:[%s1 + $0x30] sm:$0xf]
  %v59 = vld [vmem:[%s1 + $0x34] sm:$0xf]
  %v60 = vld [vmem:[%s1 + $0x38] sm:$0xf]
  %v61 = vld [vmem:[%s1 + $0x3c] sm:$0xf]
  %v78 = vunpack.c.l.b16 %v30
  %v79 = vunpack.c.l.b16 %v31
  %v80 = vunpack.c.l.b16 %v32
  %v81 = vunpack.c.l.b16 %v33
  %v82 = vunpack.c.l.b16 %v34
  %v83 = vunpack.c.l.b16 %v35
  %v84 = vunpack.c.l.b16 %v36
  %v85 = vunpack.c.l.b16 %v37
  %v86 = vunpack.c.l.b16 %v38
  %v87 = vunpack.c.l.b16 %v39
  %v88 = vunpack.c.l.b16 %v40
  %v89 = vunpack.c.l.b16 %v41
  %v90 = vunpack.c.l.b16 %v42
  %v91 = vunpack.c.l.b16 %v43
  %v92 = vunpack.c.l.b16 %v44
  %v93 = vunpack.c.l.b16 %v45
  %v94 = vpack.c.b16 %v79, %v78
  %v95 = vpack.c.b16 %v81, %v80
  %v96 = vpack.c.b16 %v83, %v82
  %v97 = vpack.c.b16 %v85, %v84
  %v98 = vpack.c.b16 %v87, %v86
  %v99 = vpack.c.b16 %v89, %v88
  %v100 = vpack.c.b16 %v91, %v90
  %v101 = vpack.c.b16 %v93, %v92
  %v126 = vunpack.c.l.b16 %v46
  %v127 = vunpack.c.l.b16 %v47
  %v128 = vunpack.c.l.b16 %v48
  %v129 = vunpack.c.l.b16 %v49
  %v130 = vunpack.c.l.b16 %v50
  %v131 = vunpack.c.l.b16 %v51
  %v132 = vunpack.c.l.b16 %v52
  %v133 = vunpack.c.l.b16 %v53
  %v134 = vunpack.c.l.b16 %v54
  %v135 = vunpack.c.l.b16 %v55
  %v136 = vunpack.c.l.b16 %v56
  %v137 = vunpack.c.l.b16 %v57
  %v138 = vunpack.c.l.b16 %v58
  %v139 = vunpack.c.l.b16 %v59
  %v140 = vunpack.c.l.b16 %v60
  %v141 = vunpack.c.l.b16 %v61
  %v142 = vpack.c.b16 %v127, %v126
  %v143 = vpack.c.b16 %v129, %v128
  %v144 = vpack.c.b16 %v131, %v130
  %v145 = vpack.c.b16 %v133, %v132
  %v146 = vpack.c.b16 %v135, %v134
  %v147 = vpack.c.b16 %v137, %v136
  %v148 = vpack.c.b16 %v139, %v138
  %v149 = vpack.c.b16 %v141, %v140
  %158 = vmatprep.subr.bf16.mxu0 0
  %159 = vmatpush1.bf16.msra.mxu0 %v142
  %160 = vmatprep.subr.bf16.mxu0 0
  %161 = vmatpush1.bf16.msra.mxu0 %v143
  %162 = vmatprep.subr.bf16.mxu0 0
  %163 = vmatpush1.bf16.msra.mxu0 %v144
  %164 = vmatprep.subr.bf16.mxu0 0
  %165 = vmatpush1.bf16.msra.mxu0 %v145
  %166 = vmatprep.subr.bf16.mxu0 0
  %167 = vmatpush1.bf16.msra.mxu0 %v146
  %168 = vmatprep.subr.bf16.mxu0 0
  %169 = vmatpush1.bf16.msra.mxu0 %v147
  %170 = vmatprep.subr.bf16.mxu0 0
  %171 = vmatpush1.bf16.msra.mxu0 %v148
  %172 = vmatprep.subr.bf16.mxu0 0
  %173 = vmatpush1.bf16.msra.mxu0 %v149
  %174 = vmatprep.subr.bf16.mxu0 0
  %175 = vmatpush1.bf16.msra.mxu0 0
  %176 = vmatprep.subr.bf16.mxu0 0
  %177 = vmatpush1.bf16.msra.mxu0 0
  %178 = vmatprep.subr.bf16.mxu0 0
  %179 = vmatpush1.bf16.msra.mxu0 0
  %180 = vmatprep.subr.bf16.mxu0 0
  %181 = vmatpush1.bf16.msra.mxu0 0
  %182 = vmatprep.subr.bf16.mxu0 0
  %183 = vmatpush1.bf16.msra.mxu0 0
  %184 = vmatprep.subr.bf16.mxu0 0
  %185 = vmatpush1.bf16.msra.mxu0 0
  %186 = vmatprep.subr.bf16.mxu0 0
  %187 = vmatpush1.bf16.msra.mxu0 0
  %188 = vmatprep.subr.bf16.mxu0 0
  %189 = vmatpush1.bf16.msra.mxu0 0
  %190 = vmatprep.mubr.bf16.mxu0 0
  %191 = vmatmul.mubr.bf16.gmra.mrb[0].mxu0 %v94
  %v192 = vpop.f32.mrb[0].mxu0
  %v193 = vadd.f32 0.0, %v192
  %v194 = vpop.f32.mrb[0].mxu0
  %v195 = vpop.f32.mrb[0].mxu0
  %v196 = vadd.f32 0.0, %v195
  %v197 = vpop.f32.mrb[0].mxu0
  %198 = vmatprep.mubr.bf16.mxu0 0
  %199 = vmatmul.mubr.bf16.gmra.mrb[0].mxu0 %v95
  %v200 = vpop.f32.mrb[0].mxu0
  %v201 = vadd.f32 0.0, %v200
  %v202 = vpop.f32.mrb[0].mxu0
  %v203 = vpop.f32.mrb[0].mxu0
  %v204 = vadd.f32 0.0, %v203
  %v205 = vpop.f32.mrb[0].mxu0
  %206 = vmatprep.mubr.bf16.mxu0 0
  %207 = vmatmul.mubr.bf16.gmra.mrb[0].mxu0 %v96
  %v208 = vpop.f32.mrb[0].mxu0
  %v209 = vadd.f32 0.0, %v208
  %v210 = vpop.f32.mrb[0].mxu0
  %v211 = vpop.f32.mrb[0].mxu0
  %v212 = vadd.f32 0.0, %v211
  %v213 = vpop.f32.mrb[0].mxu0
  %214 = vmatprep.mubr.bf16.mxu0 0
  %215 = vmatmul.mubr.bf16.gmra.mrb[0].mxu0 %v97
  %v216 = vpop.f32.mrb[0].mxu0
  %v217 = vadd.f32 0.0, %v216
  %v218 = vpop.f32.mrb[0].mxu0
  %v219 = vpop.f32.mrb[0].mxu0
  %v220 = vadd.f32 0.0, %v219
  %v221 = vpop.f32.mrb[0].mxu0
  %222 = vmatprep.mubr.bf16.mxu0 0
  %223 = vmatmul.mubr.bf16.gmra.mrb[0].mxu0 %v98
  %v224 = vpop.f32.mrb[0].mxu0
  %v225 = vadd.f32 0.0, %v224
  %v226 = vpop.f32.mrb[0].mxu0
  %v227 = vpop.f32.mrb[0].mxu0
  %v228 = vadd.f32 0.0, %v227
  %v229 = vpop.f32.mrb[0].mxu0
  %230 = vmatprep.mubr.bf16.mxu0 0
  %231 = vmatmul.mubr.bf16.gmra.mrb[0].mxu0 %v99
  %v232 = vpop.f32.mrb[0].mxu0
  %v233 = vadd.f32 0.0, %v232
  %v234 = vpop.f32.mrb[0].mxu0
  %v235 = vpop.f32.mrb[0].mxu0
  %v236 = vadd.f32 0.0, %v235
  %v237 = vpop.f32.mrb[0].mxu0
  %238 = vmatprep.mubr.bf16.mxu0 0
  %239 = vmatmul.mubr.bf16.gmra.mrb[0].mxu0 %v100
  %v240 = vpop.f32.mrb[0].mxu0
  %v241 = vadd.f32 0.0, %v240
  %v242 = vpop.f32.mrb[0].mxu0
  %v243 = vpop.f32.mrb[0].mxu0
  %v244 = vadd.f32 0.0, %v243
  %v245 = vpop.f32.mrb[0].mxu0
  %246 = vmatprep.mubr.bf16.mxu0 0
  %247 = vmatmul.mubr.bf16.gmra.mrb[0].mxu0 %v101
  %v248 = vpop.f32.mrb[0].mxu0
  %v249 = vadd.f32 0.0, %v248
  %v250 = vpop.f32.mrb[0].mxu0
  %v251 = vpop.f32.mrb[0].mxu0
  %v252 = vadd.f32 0.0, %v251
  %v253 = vpop.f32.mrb[0].mxu0
  %254 = vdwg.mxu0
  %v255 = vpack.c.bf16 %v196, %v193
  %v256 = vpack.c.bf16 %v204, %v201
  %v257 = vpack.c.bf16 %v212, %v209
  %v258 = vpack.c.bf16 %v220, %v217
  %v259 = vpack.c.bf16 %v228, %v225
  %v260 = vpack.c.bf16 %v236, %v233
  %v261 = vpack.c.bf16 %v244, %v241
  %v262 = vpack.c.bf16 %v252, %v249
  %v263 = vld [vmem:[%s2] sm:$0xf]
  %v264 = vld [vmem:[%s2 + $0x4] sm:$0xf]
  %v265 = vld [vmem:[%s2 + $0x8] sm:$0xf]
  %v266 = vld [vmem:[%s2 + $0xc] sm:$0xf]
  %v267 = vld [vmem:[%s2 + $0x10] sm:$0xf]
  %v268 = vld [vmem:[%s2 + $0x14] sm:$0xf]
  %v269 = vld [vmem:[%s2 + $0x18] sm:$0xf]
  %v270 = vld [vmem:[%s2 + $0x1c] sm:$0xf]
  %v271 = vld [vmem:[%s2 + $0x20] sm:$0xf]
  %v272 = vld [vmem:[%s2 + $0x24] sm:$0xf]
  %v273 = vld [vmem:[%s2 + $0x28] sm:$0xf]
  %v274 = vld [vmem:[%s2 + $0x2c] sm:$0xf]
  %v275 = vld [vmem:[%s2 + $0x30] sm:$0xf]
  %v276 = vld [vmem:[%s2 + $0x34] sm:$0xf]
  %v277 = vld [vmem:[%s2 + $0x38] sm:$0xf]
  %v278 = vld [vmem:[%s2 + $0x3c] sm:$0xf]
  %v279 = vld [vmem:[%s3] sm:$0x1]
  %v281 = vlaneseq
  %v282 = vshrl.u32 %v281, 7
  %v283 = vsub.s32 0, %v282
  %v284 = vrot.slane %v279, %v283
  %v302 = vunpack.c.l.b16 %v263
  %v303 = vunpack.c.l.b16 %v264
  %v304 = vunpack.c.l.b16 %v265
  %v305 = vunpack.c.l.b16 %v266
  %v306 = vunpack.c.l.b16 %v267
  %v307 = vunpack.c.l.b16 %v268
  %v308 = vunpack.c.l.b16 %v269
  %v309 = vunpack.c.l.b16 %v270
  %v310 = vunpack.c.l.b16 %v271
  %v311 = vunpack.c.l.b16 %v272
  %v312 = vunpack.c.l.b16 %v273
  %v313 = vunpack.c.l.b16 %v274
  %v314 = vunpack.c.l.b16 %v275
  %v315 = vunpack.c.l.b16 %v276
  %v316 = vunpack.c.l.b16 %v277
  %v317 = vunpack.c.l.b16 %v278
  %v318 = vpack.c.b16 %v303, %v302
  %v319 = vpack.c.b16 %v305, %v304
  %v320 = vpack.c.b16 %v307, %v306
  %v321 = vpack.c.b16 %v309, %v308
  %v322 = vpack.c.b16 %v311, %v310
  %v323 = vpack.c.b16 %v313, %v312
  %v324 = vpack.c.b16 %v315, %v314
  %v325 = vpack.c.b16 %v317, %v316
  %334 = vmatprep.subr.bf16.mxu0 0
  %335 = vmatpush1.bf16.msra.mxu0 %v318
  %336 = vmatprep.subr.bf16.mxu0 0
  %337 = vmatpush1.bf16.msra.mxu0 %v319
  %338 = vmatprep.subr.bf16.mxu0 0
  %339 = vmatpush1.bf16.msra.mxu0 %v320
  %340 = vmatprep.subr.bf16.mxu0 0
  %341 = vmatpush1.bf16.msra.mxu0 %v321
  %342 = vmatprep.subr.bf16.mxu0 0
  %343 = vmatpush1.bf16.msra.mxu0 %v322
  %344 = vmatprep.subr.bf16.mxu0 0
  %345 = vmatpush1.bf16.msra.mxu0 %v323
  %346 = vmatprep.subr.bf16.mxu0 0
  %347 = vmatpush1.bf16.msra.mxu0 %v324
  %348 = vmatprep.subr.bf16.mxu0 0
  %349 = vmatpush1.bf16.msra.mxu0 %v325
  %350 = vmatprep.subr.bf16.mxu0 0
  %351 = vmatpush1.bf16.msra.mxu0 0
  %352 = vmatprep.subr.bf16.mxu0 0
  %353 = vmatpush1.bf16.msra.mxu0 0
  %354 = vmatprep.subr.bf16.mxu0 0
  %355 = vmatpush1.bf16.msra.mxu0 0
  %356 = vmatprep.subr.bf16.mxu0 0
  %357 = vmatpush1.bf16.msra.mxu0 0
  %358 = vmatprep.subr.bf16.mxu0 0
  %359 = vmatpush1.bf16.msra.mxu0 0
  %360 = vmatprep.subr.bf16.mxu0 0
  %361 = vmatpush1.bf16.msra.mxu0 0
  %362 = vmatprep.subr.bf16.mxu0 0
  %363 = vmatpush1.bf16.msra.mxu0 0
  %364 = vmatprep.subr.bf16.mxu0 0
  %365 = vmatpush1.bf16.msra.mxu0 0
  %366 = vmatprep.mubr.bf16.mxu0 0
  %367 = vmatmul.mubr.bf16.gmra.mrb[0].mxu0 %v255
  %v368 = vpop.f32.mrb[0].mxu0
  %v369 = vadd.f32 %v284, %v368
  %v370 = vpop.f32.mrb[0].mxu0
  %v371 = vpop.f32.mrb[0].mxu0
  %v372 = vadd.f32 %v284, %v371
  %v373 = vpop.f32.mrb[0].mxu0
  %374 = vmatprep.mubr.bf16.mxu0 0
  %375 = vmatmul.mubr.bf16.gmra.mrb[0].mxu0 %v256
  %v376 = vpop.f32.mrb[0].mxu0
  %v377 = vadd.f32 %v284, %v376
  %v378 = vpop.f32.mrb[0].mxu0
  %v379 = vpop.f32.mrb[0].mxu0
  %v380 = vadd.f32 %v284, %v379
  %v381 = vpop.f32.mrb[0].mxu0
  %382 = vmatprep.mubr.bf16.mxu0 0
  %383 = vmatmul.mubr.bf16.gmra.mrb[0].mxu0 %v257
  %v384 = vpop.f32.mrb[0].mxu0
  %v385 = vadd.f32 %v284, %v384
  %v386 = vpop.f32.mrb[0].mxu0
  %v387 = vpop.f32.mrb[0].mxu0
  %v388 = vadd.f32 %v284, %v387
  %v389 = vpop.f32.mrb[0].mxu0
  %390 = vmatprep.mubr.bf16.mxu0 0
  %391 = vmatmul.mubr.bf16.gmra.mrb[0].mxu0 %v258
  %v392 = vpop.f32.mrb[0].mxu0
  %v393 = vadd.f32 %v284, %v392
  %v394 = vpop.f32.mrb[0].mxu0
  %v395 = vpop.f32.mrb[0].mxu0
  %v396 = vadd.f32 %v284, %v395
  %v397 = vpop.f32.mrb[0].mxu0
  %398 = vmatprep.mubr.bf16.mxu0 0
  %399 = vmatmul.mubr.bf16.gmra.mrb[0].mxu0 %v259
  %v400 = vpop.f32.mrb[0].mxu0
  %v401 = vadd.f32 %v284, %v400
  %v402 = vpop.f32.mrb[0].mxu0
  %v403 = vpop.f32.mrb[0].mxu0
  %v404 = vadd.f32 %v284, %v403
  %v405 = vpop.f32.mrb[0].mxu0
  %406 = vmatprep.mubr.bf16.mxu0 0
  %407 = vmatmul.mubr.bf16.gmra.mrb[0].mxu0 %v260
  %v408 = vpop.f32.mrb[0].mxu0
  %v409 = vadd.f32 %v284, %v408
  %v410 = vpop.f32.mrb[0].mxu0
  %v411 = vpop.f32.mrb[0].mxu0
  %v412 = vadd.f32 %v284, %v411
  %v413 = vpop.f32.mrb[0].mxu0
  %414 = vmatprep.mubr.bf16.mxu0 0
  %415 = vmatmul.mubr.bf16.gmra.mrb[0].mxu0 %v261
  %v416 = vpop.f32.mrb[0].mxu0
  %v417 = vadd.f32 %v284, %v416
  %v418 = vpop.f32.mrb[0].mxu0
  %v419 = vpop.f32.mrb[0].mxu0
  %v420 = vadd.f32 %v284, %v419
  %v421 = vpop.f32.mrb[0].mxu0
  %422 = vmatprep.mubr.bf16.mxu0 0
  %423 = vmatmul.mubr.bf16.gmra.mrb[0].mxu0 %v262
  %v424 = vpop.f32.mrb[0].mxu0
  %v425 = vadd.f32 %v284, %v424
  %v426 = vpop.f32.mrb[0].mxu0
  %v427 = vpop.f32.mrb[0].mxu0
  %v428 = vadd.f32 %v284, %v427
  %v429 = vpop.f32.mrb[0].mxu0
  %430 = vdwg.mxu0
  %v431 = vmax.f32 %v369, 0.0
  %v432 = vmax.f32 %v372, 0.0
  %v433 = vmax.f32 %v377, 0.0
  %v434 = vmax.f32 %v380, 0.0
  %v435 = vmax.f32 %v385, 0.0
  %v436 = vmax.f32 %v388, 0.0
  %v437 = vmax.f32 %v393, 0.0
  %v438 = vmax.f32 %v396, 0.0
  %v439 = vmax.f32 %v401, 0.0
  %v440 = vmax.f32 %v404, 0.0
  %v441 = vmax.f32 %v409, 0.0
  %v442 = vmax.f32 %v412, 0.0
  %v443 = vmax.f32 %v417, 0.0
  %v444 = vmax.f32 %v420, 0.0
  %v445 = vmax.f32 %v425, 0.0
  %v446 = vmax.f32 %v428, 0.0
  %v447 = vpack.c.bf16 %v432, %v431
  %v448 = vpack.c.bf16 %v434, %v433
  %v449 = vpack.c.bf16 %v436, %v435
  %v450 = vpack.c.bf16 %v438, %v437
  %v451 = vpack.c.bf16 %v440, %v439
  %v452 = vpack.c.bf16 %v442, %v441
  %v453 = vpack.c.bf16 %v444, %v443
  %v454 = vpack.c.bf16 %v446, %v445
  %455 = vmatprep.subr.bf16.mxu0 0
  %456 = vmatpush1.bf16.msra.mxu0 %v447
  %457 = vmatprep.subr.bf16.mxu0 0
  %458 = vmatpush1.bf16.msra.mxu0 %v448
  %459 = vmatprep.subr.bf16.mxu0 0
  %460 = vmatpush1.bf16.msra.mxu0 %v449
  %461 = vmatprep.subr.bf16.mxu0 0
  %462 = vmatpush1.bf16.msra.mxu0 %v450
  %463 = vmatprep.subr.bf16.mxu0 0
  %464 = vmatpush1.bf16.msra.mxu0 %v451
  %465 = vmatprep.subr.bf16.mxu0 0
  %466 = vmatpush1.bf16.msra.mxu0 %v452
  %467 = vmatprep.subr.bf16.mxu0 0
  %468 = vmatpush1.bf16.msra.mxu0 %v453
  %469 = vmatprep.subr.bf16.mxu0 0
  %470 = vmatpush1.bf16.msra.mxu0 %v454
  %471 = vmatprep.subr.bf16.mxu0 0
  %472 = vmatpush1.bf16.msra.mxu0 0
  %473 = vmatprep.subr.bf16.mxu0 0
  %474 = vmatpush1.bf16.msra.mxu0 0
  %475 = vmatprep.subr.bf16.mxu0 0
  %476 = vmatpush1.bf16.msra.mxu0 0
  %477 = vmatprep.subr.bf16.mxu0 0
  %478 = vmatpush1.bf16.msra.mxu0 0
  %479 = vmatprep.subr.bf16.mxu0 0
  %480 = vmatpush1.bf16.msra.mxu0 0
  %481 = vmatprep.subr.bf16.mxu0 0
  %482 = vmatpush1.bf16.msra.mxu0 0
  %483 = vmatprep.subr.bf16.mxu0 0
  %484 = vmatpush1.bf16.msra.mxu0 0
  %485 = vmatprep.subr.bf16.mxu0 0
  %486 = vmatpush1.bf16.msra.mxu0 0
  %487 = vmatprep.mubr.bf16.mxu0 0
  %488 = vmatmul.mubr.bf16.gmra.mrb[0].mxu0 %v94
  %v489 = vpop.f32.mrb[0].mxu0
  %v490 = vadd.f32 0.0, %v489
  %v491 = vpop.f32.mrb[0].mxu0
  %v492 = vpop.f32.mrb[0].mxu0
  %v493 = vadd.f32 0.0, %v492
  %v494 = vpop.f32.mrb[0].mxu0
  %495 = vmatprep.mubr.bf16.mxu0 0
  %496 = vmatmul.mubr.bf16.gmra.mrb[0].mxu0 %v95
  %v497 = vpop.f32.mrb[0].mxu0
  %v498 = vadd.f32 0.0, %v497
  %v499 = vpop.f32.mrb[0].mxu0
  %v500 = vpop.f32.mrb[0].mxu0
  %v501 = vadd.f32 0.0, %v500
  %v502 = vpop.f32.mrb[0].mxu0
  %503 = vmatprep.mubr.bf16.mxu0 0
  %504 = vmatmul.mubr.bf16.gmra.mrb[0].mxu0 %v96
  %v505 = vpop.f32.mrb[0].mxu0
  %v506 = vadd.f32 0.0, %v505
  %v507 = vpop.f32.mrb[0].mxu0
  %v508 = vpop.f32.mrb[0].mxu0
  %v509 = vadd.f32 0.0, %v508
  %v510 = vpop.f32.mrb[0].mxu0
  %511 = vmatprep.mubr.bf16.mxu0 0
  %512 = vmatmul.mubr.bf16.gmra.mrb[0].mxu0 %v97
  %v513 = vpop.f32.mrb[0].mxu0
  %v514 = vadd.f32 0.0, %v513
  %v515 = vpop.f32.mrb[0].mxu0
  %v516 = vpop.f32.mrb[0].mxu0
  %v517 = vadd.f32 0.0, %v516
  %v518 = vpop.f32.mrb[0].mxu0
  %519 = vmatprep.mubr.bf16.mxu0 0
  %520 = vmatmul.mubr.bf16.gmra.mrb[0].mxu0 %v98
  %v521 = vpop.f32.mrb[0].mxu0
  %v522 = vadd.f32 0.0, %v521
  %v523 = vpop.f32.mrb[0].mxu0
  %v524 = vpop.f32.mrb[0].mxu0
  %v525 = vadd.f32 0.0, %v524
  %v526 = vpop.f32.mrb[0].mxu0
  %527 = vmatprep.mubr.bf16.mxu0 0
  %528 = vmatmul.mubr.bf16.gmra.mrb[0].mxu0 %v99
  %v529 = vpop.f32.mrb[0].mxu0
  %v530 = vadd.f32 0.0, %v529
  %v531 = vpop.f32.mrb[0].mxu0
  %v532 = vpop.f32.mrb[0].mxu0
  %v533 = vadd.f32 0.0, %v532
  %v534 = vpop.f32.mrb[0].mxu0
  %535 = vmatprep.mubr.bf16.mxu0 0
  %536 = vmatmul.mubr.bf16.gmra.mrb[0].mxu0 %v100
  %v537 = vpop.f32.mrb[0].mxu0
  %v538 = vadd.f32 0.0, %v537
  %v539 = vpop.f32.mrb[0].mxu0
  %v540 = vpop.f32.mrb[0].mxu0
  %v541 = vadd.f32 0.0, %v540
  %v542 = vpop.f32.mrb[0].mxu0
  %543 = vmatprep.mubr.bf16.mxu0 0
  %544 = vmatmul.mubr.bf16.gmra.mrb[0].mxu0 %v101
  %v545 = vpop.f32.mrb[0].mxu0
  %v546 = vadd.f32 0.0, %v545
  %v547 = vpop.f32.mrb[0].mxu0
  %v548 = vpop.f32.mrb[0].mxu0
  %v549 = vadd.f32 0.0, %v548
  %v550 = vpop.f32.mrb[0].mxu0
  %551 = vdwg.mxu0
  %v552 = vpack.c.bf16 %v493, %v490
  %v553 = vpack.c.bf16 %v501, %v498
  %v554 = vpack.c.bf16 %v509, %v506
  %v555 = vpack.c.bf16 %v517, %v514
  %v556 = vpack.c.bf16 %v525, %v522
  %v557 = vpack.c.bf16 %v533, %v530
  %v558 = vpack.c.bf16 %v541, %v538
  %v559 = vpack.c.bf16 %v549, %v546
  %v560 = vld [vmem:[%s4] sm:$0xf]
  %v561 = vld [vmem:[%s4 + $0x4] sm:$0xf]
  %v562 = vld [vmem:[%s4 + $0x8] sm:$0xf]
  %v563 = vld [vmem:[%s4 + $0xc] sm:$0xf]
  %v564 = vld [vmem:[%s4 + $0x10] sm:$0xf]
  %v565 = vld [vmem:[%s4 + $0x14] sm:$0xf]
  %v566 = vld [vmem:[%s4 + $0x18] sm:$0xf]
  %v567 = vld [vmem:[%s4 + $0x1c] sm:$0xf]
  %v568 = vld [vmem:[%s4 + $0x20] sm:$0xf]
  %v569 = vld [vmem:[%s4 + $0x24] sm:$0xf]
  %v570 = vld [vmem:[%s4 + $0x28] sm:$0xf]
  %v571 = vld [vmem:[%s4 + $0x2c] sm:$0xf]
  %v572 = vld [vmem:[%s4 + $0x30] sm:$0xf]
  %v573 = vld [vmem:[%s4 + $0x34] sm:$0xf]
  %v574 = vld [vmem:[%s4 + $0x38] sm:$0xf]
  %v575 = vld [vmem:[%s4 + $0x3c] sm:$0xf]
  %v576 = vld [vmem:[%s5] sm:$0x1]
  %v578 = vlaneseq
  %v579 = vshrl.u32 %v578, 7
  %v580 = vsub.s32 0, %v579
  %v581 = vrot.slane %v576, %v580
  %v599 = vunpack.c.l.b16 %v560
  %v600 = vunpack.c.l.b16 %v561
  %v601 = vunpack.c.l.b16 %v562
  %v602 = vunpack.c.l.b16 %v563
  %v603 = vunpack.c.l.b16 %v564
  %v604 = vunpack.c.l.b16 %v565
  %v605 = vunpack.c.l.b16 %v566
  %v606 = vunpack.c.l.b16 %v567
  %v607 = vunpack.c.l.b16 %v568
  %v608 = vunpack.c.l.b16 %v569
  %v609 = vunpack.c.l.b16 %v570
  %v610 = vunpack.c.l.b16 %v571
  %v611 = vunpack.c.l.b16 %v572
  %v612 = vunpack.c.l.b16 %v573
  %v613 = vunpack.c.l.b16 %v574
  %v614 = vunpack.c.l.b16 %v575
  %v615 = vpack.c.b16 %v600, %v599
  %v616 = vpack.c.b16 %v602, %v601
  %v617 = vpack.c.b16 %v604, %v603
  %v618 = vpack.c.b16 %v606, %v605
  %v619 = vpack.c.b16 %v608, %v607
  %v620 = vpack.c.b16 %v610, %v609
  %v621 = vpack.c.b16 %v612, %v611
  %v622 = vpack.c.b16 %v614, %v613
  %631 = vmatprep.subr.bf16.mxu0 0
  %632 = vmatpush1.bf16.msra.mxu0 %v615
  %633 = vmatprep.subr.bf16.mxu0 0
  %634 = vmatpush1.bf16.msra.mxu0 %v616
  %635 = vmatprep.subr.bf16.mxu0 0
  %636 = vmatpush1.bf16.msra.mxu0 %v617
  %637 = vmatprep.subr.bf16.mxu0 0
  %638 = vmatpush1.bf16.msra.mxu0 %v618
  %639 = vmatprep.subr.bf16.mxu0 0
  %640 = vmatpush1.bf16.msra.mxu0 %v619
  %641 = vmatprep.subr.bf16.mxu0 0
  %642 = vmatpush1.bf16.msra.mxu0 %v620
  %643 = vmatprep.subr.bf16.mxu0 0
  %644 = vmatpush1.bf16.msra.mxu0 %v621
  %645 = vmatprep.subr.bf16.mxu0 0
  %646 = vmatpush1.bf16.msra.mxu0 %v622
  %647 = vmatprep.subr.bf16.mxu0 0
  %648 = vmatpush1.bf16.msra.mxu0 0
  %649 = vmatprep.subr.bf16.mxu0 0
  %650 = vmatpush1.bf16.msra.mxu0 0
  %651 = vmatprep.subr.bf16.mxu0 0
  %652 = vmatpush1.bf16.msra.mxu0 0
  %653 = vmatprep.subr.bf16.mxu0 0
  %654 = vmatpush1.bf16.msra.mxu0 0
  %655 = vmatprep.subr.bf16.mxu0 0
  %656 = vmatpush1.bf16.msra.mxu0 0
  %657 = vmatprep.subr.bf16.mxu0 0
  %658 = vmatpush1.bf16.msra.mxu0 0
  %659 = vmatprep.subr.bf16.mxu0 0
  %660 = vmatpush1.bf16.msra.mxu0 0
  %661 = vmatprep.subr.bf16.mxu0 0
  %662 = vmatpush1.bf16.msra.mxu0 0
  %663 = vmatprep.mubr.bf16.mxu0 0
  %664 = vmatmul.mubr.bf16.gmra.mrb[0].mxu0 %v552
  %v665 = vpop.f32.mrb[0].mxu0
  %v666 = vadd.f32 %v581, %v665
  %v667 = vpop.f32.mrb[0].mxu0
  %v668 = vpop.f32.mrb[0].mxu0
  %v669 = vadd.f32 %v581, %v668
  %v670 = vpop.f32.mrb[0].mxu0
  %671 = vmatprep.mubr.bf16.mxu0 0
  %672 = vmatmul.mubr.bf16.gmra.mrb[0].mxu0 %v553
  %v673 = vpop.f32.mrb[0].mxu0
  %v674 = vadd.f32 %v581, %v673
  %v675 = vpop.f32.mrb[0].mxu0
  %v676 = vpop.f32.mrb[0].mxu0
  %v677 = vadd.f32 %v581, %v676
  %v678 = vpop.f32.mrb[0].mxu0
  %679 = vmatprep.mubr.bf16.mxu0 0
  %680 = vmatmul.mubr.bf16.gmra.mrb[0].mxu0 %v554
  %v681 = vpop.f32.mrb[0].mxu0
  %v682 = vadd.f32 %v581, %v681
  %v683 = vpop.f32.mrb[0].mxu0
  %v684 = vpop.f32.mrb[0].mxu0
  %v685 = vadd.f32 %v581, %v684
  %v686 = vpop.f32.mrb[0].mxu0
  %687 = vmatprep.mubr.bf16.mxu0 0
  %688 = vmatmul.mubr.bf16.gmra.mrb[0].mxu0 %v555
  %v689 = vpop.f32.mrb[0].mxu0
  %v690 = vadd.f32 %v581, %v689
  %v691 = vpop.f32.mrb[0].mxu0
  %v692 = vpop.f32.mrb[0].mxu0
  %v693 = vadd.f32 %v581, %v692
  %v694 = vpop.f32.mrb[0].mxu0
  %695 = vmatprep.mubr.bf16.mxu0 0
  %696 = vmatmul.mubr.bf16.gmra.mrb[0].mxu0 %v556
  %v697 = vpop.f32.mrb[0].mxu0
  %v698 = vadd.f32 %v581, %v697
  %v699 = vpop.f32.mrb[0].mxu0
  %v700 = vpop.f32.mrb[0].mxu0
  %v701 = vadd.f32 %v581, %v700
  %v702 = vpop.f32.mrb[0].mxu0
  %703 = vmatprep.mubr.bf16.mxu0 0
  %704 = vmatmul.mubr.bf16.gmra.mrb[0].mxu0 %v557
  %v705 = vpop.f32.mrb[0].mxu0
  %v706 = vadd.f32 %v581, %v705
  %v707 = vpop.f32.mrb[0].mxu0
  %v708 = vpop.f32.mrb[0].mxu0
  %v709 = vadd.f32 %v581, %v708
  %v710 = vpop.f32.mrb[0].mxu0
  %711 = vmatprep.mubr.bf16.mxu0 0
  %712 = vmatmul.mubr.bf16.gmra.mrb[0].mxu0 %v558
  %v713 = vpop.f32.mrb[0].mxu0
  %v714 = vadd.f32 %v581, %v713
  %v715 = vpop.f32.mrb[0].mxu0
  %v716 = vpop.f32.mrb[0].mxu0
  %v717 = vadd.f32 %v581, %v716
  %v718 = vpop.f32.mrb[0].mxu0
  %719 = vmatprep.mubr.bf16.mxu0 0
  %720 = vmatmul.mubr.bf16.gmra.mrb[0].mxu0 %v559
  %v721 = vpop.f32.mrb[0].mxu0
  %v722 = vadd.f32 %v581, %v721
  %v723 = vpop.f32.mrb[0].mxu0
  %v724 = vpop.f32.mrb[0].mxu0
  %v725 = vadd.f32 %v581, %v724
  %v726 = vpop.f32.mrb[0].mxu0
  %727 = vdwg.mxu0
  %v728 = vmax.f32 %v666, 0.0
  %v729 = vmax.f32 %v669, 0.0
  %v730 = vmax.f32 %v674, 0.0
  %v731 = vmax.f32 %v677, 0.0
  %v732 = vmax.f32 %v682, 0.0
  %v733 = vmax.f32 %v685, 0.0
  %v734 = vmax.f32 %v690, 0.0
  %v735 = vmax.f32 %v693, 0.0
  %v736 = vmax.f32 %v698, 0.0
  %v737 = vmax.f32 %v701, 0.0
  %v738 = vmax.f32 %v706, 0.0
  %v739 = vmax.f32 %v709, 0.0
  %v740 = vmax.f32 %v714, 0.0
  %v741 = vmax.f32 %v717, 0.0
  %v742 = vmax.f32 %v722, 0.0
  %v743 = vmax.f32 %v725, 0.0
  %v744 = vpack.c.bf16 %v729, %v728
  %v745 = vpack.c.bf16 %v731, %v730
  %v746 = vpack.c.bf16 %v733, %v732
  %v747 = vpack.c.bf16 %v735, %v734
  %v748 = vpack.c.bf16 %v737, %v736
  %v749 = vpack.c.bf16 %v739, %v738
  %v750 = vpack.c.bf16 %v741, %v740
  %v751 = vpack.c.bf16 %v743, %v742
  %v752 = vld [vmem:[%s6] sm:$0xf]
  %v753 = vld [vmem:[%s6 + $0x4] sm:$0xf]
  %v754 = vld [vmem:[%s6 + $0x8] sm:$0xf]
  %v755 = vld [vmem:[%s6 + $0xc] sm:$0xf]
  %v756 = vld [vmem:[%s6 + $0x10] sm:$0xf]
  %v757 = vld [vmem:[%s6 + $0x14] sm:$0xf]
  %v758 = vld [vmem:[%s6 + $0x18] sm:$0xf]
  %v759 = vld [vmem:[%s6 + $0x1c] sm:$0xf]
  %v760 = vld [vmem:[%s6 + $0x20] sm:$0xf]
  %v761 = vld [vmem:[%s6 + $0x24] sm:$0xf]
  %v762 = vld [vmem:[%s6 + $0x28] sm:$0xf]
  %v763 = vld [vmem:[%s6 + $0x2c] sm:$0xf]
  %v764 = vld [vmem:[%s6 + $0x30] sm:$0xf]
  %v765 = vld [vmem:[%s6 + $0x34] sm:$0xf]
  %v766 = vld [vmem:[%s6 + $0x38] sm:$0xf]
  %v767 = vld [vmem:[%s6 + $0x3c] sm:$0xf]
  %v768 = vld [vmem:[%s7] sm:$0x1]
  %v770 = vlaneseq
  %v771 = vshrl.u32 %v770, 7
  %v772 = vsub.s32 0, %v771
  %v773 = vrot.slane %v768, %v772
  %v791 = vunpack.c.l.b16 %v752
  %v792 = vunpack.c.l.b16 %v753
  %v793 = vunpack.c.l.b16 %v754
  %v794 = vunpack.c.l.b16 %v755
  %v795 = vunpack.c.l.b16 %v756
  %v796 = vunpack.c.l.b16 %v757
  %v797 = vunpack.c.l.b16 %v758
  %v798 = vunpack.c.l.b16 %v759
  %v799 = vunpack.c.l.b16 %v760
  %v800 = vunpack.c.l.b16 %v761
  %v801 = vunpack.c.l.b16 %v762
  %v802 = vunpack.c.l.b16 %v763
  %v803 = vunpack.c.l.b16 %v764
  %v804 = vunpack.c.l.b16 %v765
  %v805 = vunpack.c.l.b16 %v766
  %v806 = vunpack.c.l.b16 %v767
  %v807 = vpack.c.b16 %v792, %v791
  %v808 = vpack.c.b16 %v794, %v793
  %v809 = vpack.c.b16 %v796, %v795
  %v810 = vpack.c.b16 %v798, %v797
  %v811 = vpack.c.b16 %v800, %v799
  %v812 = vpack.c.b16 %v802, %v801
  %v813 = vpack.c.b16 %v804, %v803
  %v814 = vpack.c.b16 %v806, %v805
  %823 = vmatprep.subr.bf16.mxu0 0
  %824 = vmatpush1.bf16.msra.mxu0 %v807
  %825 = vmatprep.subr.bf16.mxu0 0
  %826 = vmatpush1.bf16.msra.mxu0 %v808
  %827 = vmatprep.subr.bf16.mxu0 0
  %828 = vmatpush1.bf16.msra.mxu0 %v809
  %829 = vmatprep.subr.bf16.mxu0 0
  %830 = vmatpush1.bf16.msra.mxu0 %v810
  %831 = vmatprep.subr.bf16.mxu0 0
  %832 = vmatpush1.bf16.msra.mxu0 %v811
  %833 = vmatprep.subr.bf16.mxu0 0
  %834 = vmatpush1.bf16.msra.mxu0 %v812
  %835 = vmatprep.subr.bf16.mxu0 0
  %836 = vmatpush1.bf16.msra.mxu0 %v813
  %837 = vmatprep.subr.bf16.mxu0 0
  %838 = vmatpush1.bf16.msra.mxu0 %v814
  %839 = vmatprep.subr.bf16.mxu0 0
  %840 = vmatpush1.bf16.msra.mxu0 0
  %841 = vmatprep.subr.bf16.mxu0 0
  %842 = vmatpush1.bf16.msra.mxu0 0
  %843 = vmatprep.subr.bf16.mxu0 0
  %844 = vmatpush1.bf16.msra.mxu0 0
  %845 = vmatprep.subr.bf16.mxu0 0
  %846 = vmatpush1.bf16.msra.mxu0 0
  %847 = vmatprep.subr.bf16.mxu0 0
  %848 = vmatpush1.bf16.msra.mxu0 0
  %849 = vmatprep.subr.bf16.mxu0 0
  %850 = vmatpush1.bf16.msra.mxu0 0
  %851 = vmatprep.subr.bf16.mxu0 0
  %852 = vmatpush1.bf16.msra.mxu0 0
  %853 = vmatprep.subr.bf16.mxu0 0
  %854 = vmatpush1.bf16.msra.mxu0 0
  %855 = vmatprep.mubr.bf16.mxu0 0
  %856 = vmatmul.mubr.bf16.gmra.mrb[0].mxu0 %v744
  %v857 = vpop.f32.mrb[0].mxu0
  %v858 = vadd.f32 %v773, %v857
  %v859 = vpop.f32.mrb[0].mxu0
  %v860 = vpop.f32.mrb[0].mxu0
  %v861 = vadd.f32 %v773, %v860
  %v862 = vpop.f32.mrb[0].mxu0
  %863 = vmatprep.mubr.bf16.mxu0 0
  %864 = vmatmul.mubr.bf16.gmra.mrb[0].mxu0 %v745
  %v865 = vpop.f32.mrb[0].mxu0
  %v866 = vadd.f32 %v773, %v865
  %v867 = vpop.f32.mrb[0].mxu0
  %v868 = vpop.f32.mrb[0].mxu0
  %v869 = vadd.f32 %v773, %v868
  %v870 = vpop.f32.mrb[0].mxu0
  %871 = vmatprep.mubr.bf16.mxu0 0
  %872 = vmatmul.mubr.bf16.gmra.mrb[0].mxu0 %v746
  %v873 = vpop.f32.mrb[0].mxu0
  %v874 = vadd.f32 %v773, %v873
  %v875 = vpop.f32.mrb[0].mxu0
  %v876 = vpop.f32.mrb[0].mxu0
  %v877 = vadd.f32 %v773, %v876
  %v878 = vpop.f32.mrb[0].mxu0
  %879 = vmatprep.mubr.bf16.mxu0 0
  %880 = vmatmul.mubr.bf16.gmra.mrb[0].mxu0 %v747
  %v881 = vpop.f32.mrb[0].mxu0
  %v882 = vadd.f32 %v773, %v881
  %v883 = vpop.f32.mrb[0].mxu0
  %v884 = vpop.f32.mrb[0].mxu0
  %v885 = vadd.f32 %v773, %v884
  %v886 = vpop.f32.mrb[0].mxu0
  %887 = vmatprep.mubr.bf16.mxu0 0
  %888 = vmatmul.mubr.bf16.gmra.mrb[0].mxu0 %v748
  %v889 = vpop.f32.mrb[0].mxu0
  %v890 = vadd.f32 %v773, %v889
  %v891 = vpop.f32.mrb[0].mxu0
  %v892 = vpop.f32.mrb[0].mxu0
  %v893 = vadd.f32 %v773, %v892
  %v894 = vpop.f32.mrb[0].mxu0
  %895 = vmatprep.mubr.bf16.mxu0 0
  %896 = vmatmul.mubr.bf16.gmra.mrb[0].mxu0 %v749
  %v897 = vpop.f32.mrb[0].mxu0
  %v898 = vadd.f32 %v773, %v897
  %v899 = vpop.f32.mrb[0].mxu0
  %v900 = vpop.f32.mrb[0].mxu0
  %v901 = vadd.f32 %v773, %v900
  %v902 = vpop.f32.mrb[0].mxu0
  %903 = vmatprep.mubr.bf16.mxu0 0
  %904 = vmatmul.mubr.bf16.gmra.mrb[0].mxu0 %v750
  %v905 = vpop.f32.mrb[0].mxu0
  %v906 = vadd.f32 %v773, %v905
  %v907 = vpop.f32.mrb[0].mxu0
  %v908 = vpop.f32.mrb[0].mxu0
  %v909 = vadd.f32 %v773, %v908
  %v910 = vpop.f32.mrb[0].mxu0
  %911 = vmatprep.mubr.bf16.mxu0 0
  %912 = vmatmul.mubr.bf16.gmra.mrb[0].mxu0 %v751
  %v913 = vpop.f32.mrb[0].mxu0
  %v914 = vadd.f32 %v773, %v913
  %v915 = vpop.f32.mrb[0].mxu0
  %v916 = vpop.f32.mrb[0].mxu0
  %v917 = vadd.f32 %v773, %v916
  %v918 = vpop.f32.mrb[0].mxu0
  %919 = vdwg.mxu0
  %920 = vst [vmem:[%s8] sm:$0xff] %v858
  %921 = vst [vmem:[%s8 + $0x8] sm:$0xff] %v861
  %922 = vst [vmem:[%s8 + $0x10] sm:$0xff] %v866
  %923 = vst [vmem:[%s8 + $0x18] sm:$0xff] %v869
  %924 = vst [vmem:[%s8 + $0x20] sm:$0xff] %v874
  %925 = vst [vmem:[%s8 + $0x28] sm:$0xff] %v877
  %926 = vst [vmem:[%s8 + $0x30] sm:$0xff] %v882
  %927 = vst [vmem:[%s8 + $0x38] sm:$0xff] %v885
  %928 = vst [vmem:[%s8 + $0x40] sm:$0xff] %v890
  %929 = vst [vmem:[%s8 + $0x48] sm:$0xff] %v893
  %930 = vst [vmem:[%s8 + $0x50] sm:$0xff] %v898
  %931 = vst [vmem:[%s8 + $0x58] sm:$0xff] %v901
  %932 = vst [vmem:[%s8 + $0x60] sm:$0xff] %v906
  %933 = vst [vmem:[%s8 + $0x68] sm:$0xff] %v909
  %934 = vst [vmem:[%s8 + $0x70] sm:$0xff] %v914
  %935 = vst [vmem:[%s8 + $0x78] sm:$0xff] %v917
  // Predicated region
  $region34: #{gcn_forward.1} parent=0 // pred_check
    _
  $region35: #{gcn_forward.1} parent=0 // pred_check_branch
    %937 = sbr.rel (0) target = $region37
  $region36: #{gcn_forward.1} parent=0 // pred_region
    _
  $region37: #{gcn_forward.1} parent=0 // pred_fallthru
    _
  // Predicated region
  $region38: #{gcn_forward.1} parent=0 // pred_check
    _
  $region39: #{gcn_forward.1} parent=0 // pred_check_branch
    %939 = sbr.rel (0) target = $region41
  $region40: #{gcn_forward.1} parent=0 // pred_region
    _
  $region41: #{gcn_forward.1} parent=0 // pred_fallthru
    _

</llo_original>
